<compile_context>
chip_gen: v7x
topology: tpu7x:2x2x1
jax: 0.10.0
libtpu: 0.0.40
codegen_flags: <defaults>
</compile_context>

<pallas_src>
import functools

import jax
import jax.numpy as jnp
from jax.experimental import pallas as pl
from jax.experimental.pallas import tpu as pltpu


# ---------------------------------------------------------------------------
# Fused GeomGCNDGL layer kernel (all heads, all divisions, merges, norm, act).
# ---------------------------------------------------------------------------
def _geomgcn_layer_kernel(x_ref, w_ref, lab_ref, norm_all_ref, norm_row_ref,
                          out_ref, *, num_divisions, num_heads, out_feats,
                          ggcn_merge, channel_merge, apply_relu):
    D, H, F = num_divisions, num_heads, out_feats
    HW = H * F

    # Hoisted, head-fused projection for ALL source nodes:
    #   (N, Fin) @ (Fin, D*H*F) -> (N, D*H*F), scaled by per-node norm.
    wh = jnp.dot(x_ref[...], w_ref[...], preferred_element_type=jnp.float32)
    wh = wh * norm_all_ref[...]

    # Packed int8 division labels for this destination-row tile, expanded to
    # f32 once (HBM traffic: 1 byte/edge-slot total instead of D*4 bytes).
    lab = lab_ref[...].astype(jnp.float32)          # (TM, N)
    norm_rows = norm_row_ref[...]                   # (TM, 1)

    # Per-division message-passing (copy_u + sum) for all heads at once:
    #   ha[d][v, h*F + f] = sum_u [edge u->v in division d] * Wh_{h,d}[u, f]
    ha = []
    for d in range(D):                              # static unroll
        adj_d = (lab == float(d + 1)).astype(jnp.float32)
        ha.append(jnp.dot(adj_d, wh[:, d * HW:(d + 1) * HW],
                          preferred_element_type=jnp.float32))

    # Per-head merge over divisions (reference column order: (head, div, feat)).
    if ggcn_merge == 'cat':
        per_head = [
            jnp.concatenate([ha[d][:, h * F:(h + 1) * F] for d in range(D)],
                            axis=1)
            for h in range(H)
        ]                                           # each (TM, D*F)
        norm_scale = norm_rows
    else:  # 'mean' over divisions
        acc = ha[0]
        for d in range(1, D):
            acc = acc + ha[d]
        per_head = [acc[:, h * F:(h + 1) * F] for h in range(H)]  # each (TM, F)
        norm_scale = norm_rows * (1.0 / D)          # fold mean divisor into norm

    # Per single-channel head: norm scaling + activation.
    per_head = [ph * norm_scale for ph in per_head]
    if apply_relu:
        per_head = [jnp.maximum(ph, 0.0) for ph in per_head]

    # Channel (head) merge.
    if channel_merge == 'cat':
        out = jnp.concatenate(per_head, axis=1)
    else:  # 'mean' over heads
        out = per_head[0]
        for h in range(1, H):
            out = out + per_head[h]
        out = out * (1.0 / H)

    # One lane-dense full-width store for the row tile.
    out_ref[...] = out


def geomgcn_layer(x, head_weights, labels, norm, *, ggcn_merge, channel_merge,
                  apply_relu, row_tile=None):
    """One GeomGCNDGL layer forward (all heads fused; dropout = identity)."""
    N, Fin = x.shape
    H = len(head_weights)
    D, _, F = head_weights[0].shape
    HW = H * F

    # Fuse heads: W_fused[:, d*H*F + h*F + f] = head_weights[h][d, :, f]
    w_fused = jnp.stack(head_weights, axis=0)           # (H, D, Fin, F)
    w_fused = jnp.transpose(w_fused, (2, 1, 0, 3)).reshape(Fin, D * HW)

    width_per_head = D * F if ggcn_merge == 'cat' else F
    out_width = width_per_head * (H if channel_merge == 'cat' else 1)

    if row_tile is None:
        # Single tile at small N; 512-row tiles for larger (divisible) graphs.
        row_tile = 512 if (N > 512 and N % 512 == 0) else N
    assert N % row_tile == 0
    grid = (N // row_tile,)

    kernel = functools.partial(
        _geomgcn_layer_kernel,
        num_divisions=D, num_heads=H, out_feats=F,
        ggcn_merge=ggcn_merge, channel_merge=channel_merge,
        apply_relu=apply_relu)

    return pl.pallas_call(
        kernel,
        out_shape=jax.ShapeDtypeStruct((N, out_width), jnp.float32),
        grid=grid,
        in_specs=[
            pl.BlockSpec((N, Fin), lambda i: (0, 0)),        # x (all source nodes, resident)
            pl.BlockSpec((Fin, D * HW), lambda i: (0, 0)),   # fused weights (resident)
            pl.BlockSpec((row_tile, N), lambda i: (i, 0)),   # int8 division labels (row tile)
            pl.BlockSpec((N, 1), lambda i: (0, 0)),          # norm for all source nodes
            pl.BlockSpec((row_tile, 1), lambda i: (i, 0)),   # norm for this row tile
        ],
        out_specs=pl.BlockSpec((row_tile, out_width), lambda i: (i, 0)),
        compiler_params=pltpu.CompilerParams(
            dimension_semantics=("parallel",)),
    )(x, w_fused, labels, norm, norm)


def geomgcn_net_forward(x, params, labels, norm, cfg):
    # NB: the reference module passes layer_one_ggcn_merge for BOTH the ggcn
    # merge and the channel merge of layer 1 — reproduced here.
    x = geomgcn_layer(x, params['layer1'], labels, norm,
                      ggcn_merge=cfg['l1_ggcn_merge'],
                      channel_merge=cfg['l1_ggcn_merge'],
                      apply_relu=True)               # activation = F.relu
    x = geomgcn_layer(x, params['layer2'], labels, norm,
                      ggcn_merge=cfg['l2_ggcn_merge'],
                      channel_merge=cfg['l2_channel_merge'],
                      apply_relu=False)              # activation = identity
    return x


# ---------------------------------------------------------------------------
# Pure-JAX reference (faithful to the PyTorch module, for correctness check).
# ---------------------------------------------------------------------------
def _ref_single_channel(x, w, adj, norm, merge, apply_relu):
    hs = []
    for d in range(w.shape[0]):
        wh = (x @ w[d]) * norm
        hs.append(adj[d] @ wh)
    if merge == 'cat':
        h = jnp.concatenate(hs, axis=-1)
    else:
        h = jnp.mean(jnp.stack(hs, axis=-1), axis=-1)
    h = h * norm
    if apply_relu:
        h = jnp.maximum(h, 0.0)
    return h


def _ref_layer(x, head_weights, adj, norm, ggcn_merge, channel_merge, relu):
    outs = [_ref_single_channel(x, w, adj, norm, ggcn_merge, relu)
            for w in head_weights]
    if channel_merge == 'cat':
        return jnp.concatenate(outs, axis=1)
    return jnp.mean(jnp.stack(outs, axis=0), axis=0)


def _ref_net(x, params, adj, norm, cfg):
    x = _ref_layer(x, params['layer1'], adj, norm,
                   cfg['l1_ggcn_merge'], cfg['l1_ggcn_merge'], True)
    x = _ref_layer(x, params['layer2'], adj, norm,
                   cfg['l2_ggcn_merge'], cfg['l2_channel_merge'], False)
    return x


# ---------------------------------------------------------------------------
# Parameter / data construction.
# ---------------------------------------------------------------------------
def xavier_uniform(key, fan_in, fan_out):
    a = (6.0 / (fan_in + fan_out)) ** 0.5
    return jax.random.uniform(key, (fan_in, fan_out), jnp.float32, -a, a)


def make_head_weights(key, num_heads, num_divisions, fin, fout):
    keys = jax.random.split(key, num_heads * num_divisions)
    heads = []
    for h in range(num_heads):
        w = jnp.stack([xavier_uniform(keys[h * num_divisions + d], fin, fout)
                       for d in range(num_divisions)], axis=0)
        heads.append(w)
    return heads


if __name__ == "__main__":
    # Small synthetic graph / model config.
    N = 32                      # nodes
    F_IN = 16                   # num_input_features
    HIDDEN = 8                  # num_hidden
    NUM_CLASSES = 4             # num_output_classes
    D = 2                       # num_divisions
    H1 = 2                      # num_heads_layer_one
    H2 = 2                      # num_heads_layer_two

    cfg = dict(l1_ggcn_merge='cat', l1_channel_merge='cat',
               l2_ggcn_merge='mean', l2_channel_merge='mean')

    key = jax.random.PRNGKey(0)
    k_feat, k_edge, k_div, k_w1, k_w2 = jax.random.split(key, 5)

    # Node features.
    features = jax.random.normal(k_feat, (N, F_IN), jnp.float32)

    # Random directed graph; each edge assigned to exactly one division.
    edge_mask = jax.random.bernoulli(k_edge, 0.2, (N, N))
    div_assign = jax.random.randint(k_div, (N, N), 0, D)
    # Packed adjacency: labels[v, u] = d+1 iff edge u->v is in division d, 0 = no edge.
    labels = jnp.where(edge_mask, div_assign + 1, 0).astype(jnp.int8)
    # Dense per-division adjacency only for the pure-JAX reference.
    adj = jnp.stack([(labels == (d + 1)).astype(jnp.float32) for d in range(D)],
                    axis=0)                               # (D, N, N), adj[d, v, u]

    # Symmetric-normalization-style per-node scaling (deterministic).
    in_deg = jnp.sum(adj, axis=(0, 2))
    norm = (1.0 / jnp.sqrt(in_deg + 1.0)).reshape(N, 1).astype(jnp.float32)

    # Layer-2 input size, mirroring the reference module's sizing logic.
    mult_div = D if cfg['l1_ggcn_merge'] == 'cat' else 1
    mult_head = H1 if cfg['l1_channel_merge'] == 'cat' else 1
    l2_in = HIDDEN * mult_div * mult_head

    params = {
        'layer1': make_head_weights(k_w1, H1, D, F_IN, HIDDEN),
        'layer2': make_head_weights(k_w2, H2, D, l2_in, NUM_CLASSES),
    }

    out = geomgcn_net_forward(features, params, labels, norm, cfg)
    out = jax.block_until_ready(out)

    ref = _ref_net(features, params, adj, norm, cfg)
    assert out.shape == (N, NUM_CLASSES), out.shape
    assert jnp.allclose(out, ref, atol=1e-4, rtol=1e-4), "mismatch vs reference"

    print("KERNEL_OK")
</pallas_src>

<mosaic_0001>
module attributes {stable_mosaic.version = 11 : i64} {
  func.func @_geomgcn_layer_kernel(%arg0: i32, %arg1: memref<32x16xf32, #tpu.memory_space<vmem>>, %arg2: memref<16x32xf32, #tpu.memory_space<vmem>>, %arg3: memref<32x32xi8, #tpu.memory_space<vmem>>, %arg4: memref<32x1xf32, #tpu.memory_space<vmem>>, %arg5: memref<32x1xf32, #tpu.memory_space<vmem>>, %arg6: memref<32x32xf32, #tpu.memory_space<vmem>>) attributes {dimension_semantics = [#tpu.dimension_semantics<parallel>], iteration_bounds = array<i64: 1>, scalar_prefetch = 0 : i64, scratch_operands = 0 : i64, tpu.core_type = #tpu.core_type<tc>, window_params = [{pipeline_mode = #tpu.pipeline_mode<synchronous>, transform_indices = @transform_0, window_bounds = array<i64: 32, 16>}, {pipeline_mode = #tpu.pipeline_mode<synchronous>, transform_indices = @transform_1, window_bounds = array<i64: 16, 32>}, {transform_indices = @transform_2, window_bounds = array<i64: 32, 32>}, {pipeline_mode = #tpu.pipeline_mode<synchronous>, transform_indices = @transform_3, window_bounds = array<i64: 32, 1>}, {transform_indices = @transform_4, window_bounds = array<i64: 32, 1>}, {transform_indices = @transform_5, window_bounds = array<i64: 32, 32>}]} {
    %c0 = arith.constant 0 : index
    %c0_0 = arith.constant 0 : index
    %0 = vector.load %arg1[%c0, %c0_0] : memref<32x16xf32, #tpu.memory_space<vmem>>, vector<32x16xf32>
    %c0_1 = arith.constant 0 : index
    %c0_2 = arith.constant 0 : index
    %1 = vector.load %arg2[%c0_1, %c0_2] : memref<16x32xf32, #tpu.memory_space<vmem>>, vector<16x32xf32>
    %cst = arith.constant dense<0.000000e+00> : vector<32x32xf32>
    %2 = tpu.matmul %0, %1, %cst {dimension_numbers = #tpu.dot_dimension_numbers<[1], [0], [0], [1], [0, 0, 1, 1], [], []>} : vector<32x16xf32>, vector<16x32xf32>, vector<32x32xf32> -> vector<32x32xf32>
    %c0_3 = arith.constant 0 : index
    %c0_4 = arith.constant 0 : index
    %3 = vector.load %arg4[%c0_3, %c0_4] : memref<32x1xf32, #tpu.memory_space<vmem>>, vector<32x1xf32>
    %4 = vector.broadcast %3 : vector<32x1xf32> to vector<32x32xf32>
    %5 = arith.mulf %2, %4 : vector<32x32xf32>
    %c0_5 = arith.constant 0 : index
    %c0_6 = arith.constant 0 : index
    %6 = vector.load %arg3[%c0_5, %c0_6] : memref<32x32xi8, #tpu.memory_space<vmem>>, vector<32x32xi8>
    %7 = arith.sitofp %6 : vector<32x32xi8> to vector<32x32xf32>
    %c0_7 = arith.constant 0 : index
    %c0_8 = arith.constant 0 : index
    %8 = vector.load %arg5[%c0_7, %c0_8] : memref<32x1xf32, #tpu.memory_space<vmem>>, vector<32x1xf32>
    %cst_9 = arith.constant 1.000000e+00 : f32
    %9 = vector.broadcast %cst_9 : f32 to vector<32x32xf32>
    %10 = arith.cmpf oeq, %7, %9 : vector<32x32xf32>
    %11 = arith.extui %10 : vector<32x32xi1> to vector<32x32xi32>
    %12 = arith.sitofp %11 : vector<32x32xi32> to vector<32x32xf32>
    %13 = vector.extract_strided_slice %5 {offsets = [0, 0], sizes = [32, 16], strides = [1, 1]} : vector<32x32xf32> to vector<32x16xf32>
    %cst_10 = arith.constant dense<0.000000e+00> : vector<32x16xf32>
    %14 = tpu.matmul %12, %13, %cst_10 {dimension_numbers = #tpu.dot_dimension_numbers<[1], [0], [0], [1], [0, 0, 1, 1], [], []>} : vector<32x32xf32>, vector<32x16xf32>, vector<32x16xf32> -> vector<32x16xf32>
    %cst_11 = arith.constant 2.000000e+00 : f32
    %15 = vector.broadcast %cst_11 : f32 to vector<32x32xf32>
    %16 = arith.cmpf oeq, %7, %15 : vector<32x32xf32>
    %17 = arith.extui %16 : vector<32x32xi1> to vector<32x32xi32>
    %18 = arith.sitofp %17 : vector<32x32xi32> to vector<32x32xf32>
    %19 = vector.extract_strided_slice %5 {offsets = [0, 16], sizes = [32, 16], strides = [1, 1]} : vector<32x32xf32> to vector<32x16xf32>
    %cst_12 = arith.constant dense<0.000000e+00> : vector<32x16xf32>
    %20 = tpu.matmul %18, %19, %cst_12 {dimension_numbers = #tpu.dot_dimension_numbers<[1], [0], [0], [1], [0, 0, 1, 1], [], []>} : vector<32x32xf32>, vector<32x16xf32>, vector<32x16xf32> -> vector<32x16xf32>
    %21 = vector.extract_strided_slice %14 {offsets = [0, 0], sizes = [32, 8], strides = [1, 1]} : vector<32x16xf32> to vector<32x8xf32>
    %22 = vector.extract_strided_slice %20 {offsets = [0, 0], sizes = [32, 8], strides = [1, 1]} : vector<32x16xf32> to vector<32x8xf32>
    %23 = tpu.concatenate %21, %22 in 1 : vector<32x8xf32>, vector<32x8xf32> -> vector<32x16xf32>
    %24 = vector.extract_strided_slice %14 {offsets = [0, 8], sizes = [32, 8], strides = [1, 1]} : vector<32x16xf32> to vector<32x8xf32>
    %25 = vector.extract_strided_slice %20 {offsets = [0, 8], sizes = [32, 8], strides = [1, 1]} : vector<32x16xf32> to vector<32x8xf32>
    %26 = tpu.concatenate %24, %25 in 1 : vector<32x8xf32>, vector<32x8xf32> -> vector<32x16xf32>
    %27 = vector.broadcast %8 : vector<32x1xf32> to vector<32x16xf32>
    %28 = arith.mulf %23, %27 : vector<32x16xf32>
    %29 = vector.broadcast %8 : vector<32x1xf32> to vector<32x16xf32>
    %30 = arith.mulf %26, %29 : vector<32x16xf32>
    %cst_13 = arith.constant 0.000000e+00 : f32
    %31 = vector.broadcast %cst_13 : f32 to vector<32x16xf32>
    %32 = arith.maximumf %28, %31 : vector<32x16xf32>
    %cst_14 = arith.constant 0.000000e+00 : f32
    %33 = vector.broadcast %cst_14 : f32 to vector<32x16xf32>
    %34 = arith.maximumf %30, %33 : vector<32x16xf32>
    %35 = tpu.concatenate %32, %34 in 1 : vector<32x16xf32>, vector<32x16xf32> -> vector<32x32xf32>
    %c0_15 = arith.constant 0 : index
    %c0_16 = arith.constant 0 : index
    %36 = vector.load %arg6[%c0_15, %c0_16] : memref<32x32xf32, #tpu.memory_space<vmem>>, vector<32x32xf32>
    tpu.vector_store %arg6[%c0_15, %c0_16], %35 {strides = array<i32>} : memref<32x32xf32, #tpu.memory_space<vmem>>, vector<32x32xf32>,
    return
  }
  func.func @transform_0(%arg0: i32) -> (i32, i32) {
    %c0_i32 = arith.constant 0 : i32
    %c0_i32_0 = arith.constant 0 : i32
    %c0_i32_1 = arith.constant 0 : i32
    return %c0_i32, %c0_i32_0 : i32, i32
  }
  func.func @transform_1(%arg0: i32) -> (i32, i32) {
    %c0_i32 = arith.constant 0 : i32
    %c0_i32_0 = arith.constant 0 : i32
    %c0_i32_1 = arith.constant 0 : i32
    return %c0_i32, %c0_i32_0 : i32, i32
  }
  func.func @transform_2(%arg0: i32) -> (i32, i32) {
    %c0_i32 = arith.constant 0 : i32
    %c0_i32_0 = arith.constant 0 : i32
    return %arg0, %c0_i32 : i32, i32
  }
  func.func @transform_3(%arg0: i32) -> (i32, i32) {
    %c0_i32 = arith.constant 0 : i32
    %c0_i32_0 = arith.constant 0 : i32
    %c0_i32_1 = arith.constant 0 : i32
    return %c0_i32, %c0_i32_0 : i32, i32
  }
  func.func @transform_4(%arg0: i32) -> (i32, i32) {
    %c0_i32 = arith.constant 0 : i32
    %c0_i32_0 = arith.constant 0 : i32
    return %arg0, %c0_i32 : i32, i32
  }
  func.func @transform_5(%arg0: i32) -> (i32, i32) {
    %c0_i32 = arith.constant 0 : i32
    %c0_i32_0 = arith.constant 0 : i32
    return %arg0, %c0_i32 : i32, i32
  }
}

</mosaic_0001>

<llo_original>
// kernel: tpu_custom_call.1
$region0: #{tpu_custom_call.1}
  #allocation0 [shape = 'u32[]', space=smem, size = 0x4, offset = 0x4, fixed_abs, tag = 'smem constant byte address 0x4 - core index']
  #allocation1 [shape = 'u32[144,128]{1,0:T(1,128)}', space=vmem, size = 0x12000, scoped, tag = 'internal scratch']
  %s0 = inlined_call_operand.vmem [shape: f32[32,16], index: 0, kind: input, shape index: {}]
  %s1 = inlined_call_operand.vmem [shape: f32[16,32], index: 1, kind: input, shape index: {}]
  %s2 = inlined_call_operand.vmem [shape: s8[32,32], index: 2, kind: input, shape index: {}]
  %s3 = inlined_call_operand.vmem [shape: f32[32,1], index: 3, kind: input, shape index: {}]
  %s4 = inlined_call_operand.vmem [shape: f32[32,1], index: 4, kind: input, shape index: {}]
  %s5 = inlined_call_operand.hbm [shape: f32[32,32], index: 5, kind: output, shape index: {}]
  %s6 = sld [smem:[#allocation0]]
  $region30: #{tpu_custom_call.1} parent=0
    _
  %s8 = ssub.s32 1, %s6
  %s9 = scalar_select 0, %s8, %s6
  $region1: #{tpu_custom_call.1} parent=0
    #allocation2 [shape = 'u8[16384]{0}', space=vmem, size = 0x4000, scoped, tag = 'output window, operand 0, single buffered']
    #allocation3 [shape = 's32[1]{0}', space=sflag, size = 0x4, scoped, tag = 'scoped memory for tpu_custom_call.1']
    %10 = vsyncpa [#allocation3], 0
    // Predicated region
    $region2: #{tpu_custom_call.1} parent=1 // pred_check
      _
    $region3: #{tpu_custom_call.1} parent=1 // pred_check_branch
      %12 = sbr.rel (0) target = $region5
    $region4: #{tpu_custom_call.1} parent=1 // pred_region
      _
    $region5: #{tpu_custom_call.1} parent=1 // pred_fallthru
      _
    // Predicated region
    $region6: #{tpu_custom_call.1} parent=1 // pred_check
      _
    $region7: #{tpu_custom_call.1} parent=1 // pred_check_branch
      %14 = sbr.rel (0) target = $region9
    $region8: #{tpu_custom_call.1} parent=1 // pred_region
      _
    $region9: #{tpu_custom_call.1} parent=1 // pred_fallthru
      _
    // Predicated region
    $region10: #{tpu_custom_call.1} parent=1 // pred_check
      _
    $region11: #{tpu_custom_call.1} parent=1 // pred_check_branch
      %16 = sbr.rel (0) target = $region13
    $region12: #{tpu_custom_call.1} parent=1 // pred_region
      _
    $region13: #{tpu_custom_call.1} parent=1 // pred_fallthru
      _
    // Predicated region
    $region14: #{tpu_custom_call.1} parent=1 // pred_check
      _
    $region15: #{tpu_custom_call.1} parent=1 // pred_check_branch
      %18 = sbr.rel (0) target = $region17
    $region16: #{tpu_custom_call.1} parent=1 // pred_region
      _
    $region17: #{tpu_custom_call.1} parent=1 // pred_fallthru
      _
    // Predicated region
    $region18: #{tpu_custom_call.1} parent=1 // pred_check
      _
    $region19: #{tpu_custom_call.1} parent=1 // pred_check_branch
      %20 = sbr.rel (0) target = $region21
    $region20: #{tpu_custom_call.1} parent=1 // pred_region
      _
    $region21: #{tpu_custom_call.1} parent=1 // pred_fallthru
      _
    %v21 = vld [vmem:[%s0] sm:$0xff]
    %v22 = vld [vmem:[%s0 + $0x8] sm:$0xff]
    %v23 = vld [vmem:[%s0 + $0x10] sm:$0xff]
    %v24 = vld [vmem:[%s0 + $0x18] sm:$0xff]
    %v25 = vld [vmem:[%s1] sm:$0xff]
    %v26 = vld [vmem:[%s1 + $0x8] sm:$0xff]
    %vm27 = vcmask 130048
    %v29 = vsel %vm27, %v21, 0
    %v32 = vsel %vm27, %v22, 0
    %v35 = vsel %vm27, %v23, 0
    %v38 = vsel %vm27, %v24, 0
    %40 = vmatprep.subr.mxu0 0.0
    %41 = vmatpush1.msra.mxu0 %v25
    %42 = vmatprep.subr.mxu0 0.0
    %43 = vmatpush1.msra.mxu0 %v26
    %44 = vmatprep.subr.mxu0 0.0
    %45 = vmatpush1.msra.mxu0 0.0
    %46 = vmatprep.subr.mxu0 0.0
    %47 = vmatpush1.msra.mxu0 0.0
    %48 = vmatprep.subr.mxu0 0.0
    %49 = vmatpush1.msra.mxu0 0.0
    %50 = vmatprep.subr.mxu0 0.0
    %51 = vmatpush1.msra.mxu0 0.0
    %52 = vmatprep.subr.mxu0 0.0
    %53 = vmatpush1.msra.mxu0 0.0
    %54 = vmatprep.subr.mxu0 0.0
    %55 = vmatpush1.msra.mxu0 0.0
    %56 = vmatprep.subr.mxu0 0.0
    %57 = vmatpush1.msra.mxu0 0.0
    %58 = vmatprep.subr.mxu0 0.0
    %59 = vmatpush1.msra.mxu0 0.0
    %60 = vmatprep.subr.mxu0 0.0
    %61 = vmatpush1.msra.mxu0 0.0
    %62 = vmatprep.subr.mxu0 0.0
    %63 = vmatpush1.msra.mxu0 0.0
    %64 = vmatprep.subr.mxu0 0.0
    %65 = vmatpush1.msra.mxu0 0.0
    %66 = vmatprep.subr.mxu0 0.0
    %67 = vmatpush1.msra.mxu0 0.0
    %68 = vmatprep.subr.mxu0 0.0
    %69 = vmatpush1.msra.mxu0 0.0
    %70 = vmatprep.subr.mxu0 0.0
    %71 = vmatpush1.msra.mxu0 0.0
    %72 = vmatprep.subr.mxu0 0.0
    %73 = vmatpush1.msra.mxu0 0.0
    %74 = vmatprep.subr.mxu0 0.0
    %75 = vmatpush1.msra.mxu0 0.0
    %76 = vmatprep.subr.mxu0 0.0
    %77 = vmatpush1.msra.mxu0 0.0
    %78 = vmatprep.subr.mxu0 0.0
    %79 = vmatpush1.msra.mxu0 0.0
    %80 = vmatprep.subr.mxu0 0.0
    %81 = vmatpush1.msra.mxu0 0.0
    %82 = vmatprep.subr.mxu0 0.0
    %83 = vmatpush1.msra.mxu0 0.0
    %84 = vmatprep.subr.mxu0 0.0
    %85 = vmatpush1.msra.mxu0 0.0
    %86 = vmatprep.subr.mxu0 0.0
    %87 = vmatpush1.msra.mxu0 0.0
    %88 = vmatprep.subr.mxu0 0.0
    %89 = vmatpush1.msra.mxu0 0.0
    %90 = vmatprep.subr.mxu0 0.0
    %91 = vmatpush1.msra.mxu0 0.0
    %92 = vmatprep.subr.mxu0 0.0
    %93 = vmatpush1.msra.mxu0 0.0
    %94 = vmatprep.subr.mxu0 0.0
    %95 = vmatpush1.msra.mxu0 0.0
    %96 = vmatprep.subr.mxu0 0.0
    %97 = vmatpush1.msra.mxu0 0.0
    %98 = vmatprep.subr.mxu0 0.0
    %99 = vmatpush1.msra.mxu0 0.0
    %100 = vmatprep.subr.mxu0 0.0
    %101 = vmatpush1.msra.mxu0 0.0
    %102 = vmatprep.subr.mxu0 0.0
    %103 = vmatpush1.msra.mxu0 0.0
    %104 = vmatprep.mubr.f32.mxu0 0.0
    %105 = vmatmul.mubr.f32.gmra.mrb[0].mxu0 %v29
    %v106 = vpop.f32.mrb[0].mxu0
    %v107 = vadd.f32 0.0, %v106
    %v108 = vpop.f32.mrb[0].mxu0
    %109 = vmatprep.mubr.f32.mxu0 0.0
    %110 = vmatmul.mubr.f32.gmra.mrb[0].mxu0 %v32
    %v111 = vpop.f32.mrb[0].mxu0
    %v112 = vadd.f32 0.0, %v111
    %v113 = vpop.f32.mrb[0].mxu0
    %114 = vmatprep.mubr.f32.mxu0 0.0
    %115 = vmatmul.mubr.f32.gmra.mrb[0].mxu0 %v35
    %v116 = vpop.f32.mrb[0].mxu0
    %v117 = vadd.f32 0.0, %v116
    %v118 = vpop.f32.mrb[0].mxu0
    %119 = vmatprep.mubr.f32.mxu0 0.0
    %120 = vmatmul.mubr.f32.gmra.mrb[0].mxu0 %v38
    %v121 = vpop.f32.mrb[0].mxu0
    %v122 = vadd.f32 0.0, %v121
    %v123 = vpop.f32.mrb[0].mxu0
    %124 = vdwg.mxu0
    %v125 = vld [vmem:[%s3] sm:$0xff]
    %v126 = vld [vmem:[%s3 + $0x8] sm:$0xff]
    %v127 = vld [vmem:[%s3 + $0x10] sm:$0xff]
    %v128 = vld [vmem:[%s3 + $0x18] sm:$0xff]
    %130 = vset.pattern.permute.xlu0 0
    %131 = vperm.xlu0 %130, %v125
    %v132 = vpop.permute.xlu0 %131
    %135 = vset.pattern.permute.xlu0 0
    %136 = vperm.xlu0 %135, %v126
    %v137 = vpop.permute.xlu0 %136
    %140 = vset.pattern.permute.xlu0 0
    %141 = vperm.xlu0 %140, %v127
    %v142 = vpop.permute.xlu0 %141
    %145 = vset.pattern.permute.xlu0 0
    %146 = vperm.xlu0 %145, %v128
    %v147 = vpop.permute.xlu0 %146
    %v149 = vmul.f32 %v107, %v132
    %v150 = vmul.f32 %v112, %v137
    %v151 = vmul.f32 %v117, %v142
    %v152 = vmul.f32 %v122, %v147
    %v153 = vld [vmem:[%s2] sm:$0xff]
    %v154 = vunpack.c.0.s8 %v153
    %v155 = vunpack.c.1.s8 %v153
    %v156 = vunpack.c.2.s8 %v153
    %v157 = vunpack.c.3.s8 %v153
    %v158 = vcvt.s32.f32 %v154
    %v159 = vcvt.s32.f32 %v155
    %v160 = vcvt.s32.f32 %v156
    %v161 = vcvt.s32.f32 %v157
    %v162 = vld [vmem:[%s4] sm:$0xff]
    %v163 = vld [vmem:[%s4 + $0x8] sm:$0xff]
    %v164 = vld [vmem:[%s4 + $0x10] sm:$0xff]
    %v165 = vld [vmem:[%s4 + $0x18] sm:$0xff]
    %vm166 = vcmp.eq.f32.partialorder %v158, 1.0
    %vm167 = vcmp.eq.f32.partialorder %v159, 1.0
    %vm168 = vcmp.eq.f32.partialorder %v160, 1.0
    %vm169 = vcmp.eq.f32.partialorder %v161, 1.0
    %v170 = vsel %vm166, 1, 0
    %v171 = vsel %vm167, 1, 0
    %v172 = vsel %vm168, 1, 0
    %v173 = vsel %vm169, 1, 0
    %v174 = vcvt.s32.f32 %v170
    %v175 = vcvt.s32.f32 %v171
    %v176 = vcvt.s32.f32 %v172
    %v177 = vcvt.s32.f32 %v173
    %vm178 = vcmask 261120
    %v180 = vsel %vm178, %v174, 0
    %v183 = vsel %vm178, %v175, 0
    %v186 = vsel %vm178, %v176, 0
    %v189 = vsel %vm178, %v177, 0
    %191 = vmatprep.subr.mxu0 0.0
    %192 = vmatpush1.msra.mxu0 %v149
    %193 = vmatprep.subr.mxu0 0.0
    %194 = vmatpush1.msra.mxu0 %v150
    %195 = vmatprep.subr.mxu0 0.0
    %196 = vmatpush1.msra.mxu0 %v151
    %197 = vmatprep.subr.mxu0 0.0
    %198 = vmatpush1.msra.mxu0 %v152
    %199 = vmatprep.subr.mxu0 0.0
    %200 = vmatpush1.msra.mxu0 0.0
    %201 = vmatprep.subr.mxu0 0.0
    %202 = vmatpush1.msra.mxu0 0.0
    %203 = vmatprep.subr.mxu0 0.0
    %204 = vmatpush1.msra.mxu0 0.0
    %205 = vmatprep.subr.mxu0 0.0
    %206 = vmatpush1.msra.mxu0 0.0
    %207 = vmatprep.subr.mxu0 0.0
    %208 = vmatpush1.msra.mxu0 0.0
    %209 = vmatprep.subr.mxu0 0.0
    %210 = vmatpush1.msra.mxu0 0.0
    %211 = vmatprep.subr.mxu0 0.0
    %212 = vmatpush1.msra.mxu0 0.0
    %213 = vmatprep.subr.mxu0 0.0
    %214 = vmatpush1.msra.mxu0 0.0
    %215 = vmatprep.subr.mxu0 0.0
    %216 = vmatpush1.msra.mxu0 0.0
    %217 = vmatprep.subr.mxu0 0.0
    %218 = vmatpush1.msra.mxu0 0.0
    %219 = vmatprep.subr.mxu0 0.0
    %220 = vmatpush1.msra.mxu0 0.0
    %221 = vmatprep.subr.mxu0 0.0
    %222 = vmatpush1.msra.mxu0 0.0
    %223 = vmatprep.subr.mxu0 0.0
    %224 = vmatpush1.msra.mxu0 0.0
    %225 = vmatprep.subr.mxu0 0.0
    %226 = vmatpush1.msra.mxu0 0.0
    %227 = vmatprep.subr.mxu0 0.0
    %228 = vmatpush1.msra.mxu0 0.0
    %229 = vmatprep.subr.mxu0 0.0
    %230 = vmatpush1.msra.mxu0 0.0
    %231 = vmatprep.subr.mxu0 0.0
    %232 = vmatpush1.msra.mxu0 0.0
    %233 = vmatprep.subr.mxu0 0.0
    %234 = vmatpush1.msra.mxu0 0.0
    %235 = vmatprep.subr.mxu0 0.0
    %236 = vmatpush1.msra.mxu0 0.0
    %237 = vmatprep.subr.mxu0 0.0
    %238 = vmatpush1.msra.mxu0 0.0
    %239 = vmatprep.subr.mxu0 0.0
    %240 = vmatpush1.msra.mxu0 0.0
    %241 = vmatprep.subr.mxu0 0.0
    %242 = vmatpush1.msra.mxu0 0.0
    %243 = vmatprep.subr.mxu0 0.0
    %244 = vmatpush1.msra.mxu0 0.0
    %245 = vmatprep.subr.mxu0 0.0
    %246 = vmatpush1.msra.mxu0 0.0
    %247 = vmatprep.subr.mxu0 0.0
    %248 = vmatpush1.msra.mxu0 0.0
    %249 = vmatprep.subr.mxu0 0.0
    %250 = vmatpush1.msra.mxu0 0.0
    %251 = vmatprep.subr.mxu0 0.0
    %252 = vmatpush1.msra.mxu0 0.0
    %253 = vmatprep.subr.mxu0 0.0
    %254 = vmatpush1.msra.mxu0 0.0
    %255 = vmatprep.mubr.f32.mxu0 0.0
    %256 = vmatmul.mubr.f32.gmra.mrb[0].mxu0 %v180
    %v257 = vpop.f32.mrb[0].mxu0
    %v258 = vadd.f32 0.0, %v257
    %v259 = vpop.f32.mrb[0].mxu0
    %260 = vmatprep.mubr.f32.mxu0 0.0
    %261 = vmatmul.mubr.f32.gmra.mrb[0].mxu0 %v183
    %v262 = vpop.f32.mrb[0].mxu0
    %v263 = vadd.f32 0.0, %v262
    %v264 = vpop.f32.mrb[0].mxu0
    %265 = vmatprep.mubr.f32.mxu0 0.0
    %266 = vmatmul.mubr.f32.gmra.mrb[0].mxu0 %v186
    %v267 = vpop.f32.mrb[0].mxu0
    %v268 = vadd.f32 0.0, %v267
    %v269 = vpop.f32.mrb[0].mxu0
    %270 = vmatprep.mubr.f32.mxu0 0.0
    %271 = vmatmul.mubr.f32.gmra.mrb[0].mxu0 %v189
    %v272 = vpop.f32.mrb[0].mxu0
    %v273 = vadd.f32 0.0, %v272
    %v274 = vpop.f32.mrb[0].mxu0
    %275 = vdwg.mxu0
    %vm276 = vcmp.eq.f32.partialorder %v158, 2.0
    %vm277 = vcmp.eq.f32.partialorder %v159, 2.0
    %vm278 = vcmp.eq.f32.partialorder %v160, 2.0
    %vm279 = vcmp.eq.f32.partialorder %v161, 2.0
    %v280 = vsel %vm276, 1, 0
    %v281 = vsel %vm277, 1, 0
    %v282 = vsel %vm278, 1, 0
    %v283 = vsel %vm279, 1, 0
    %v284 = vcvt.s32.f32 %v280
    %v285 = vcvt.s32.f32 %v281
    %v286 = vcvt.s32.f32 %v282
    %v287 = vcvt.s32.f32 %v283
    %292 = vrot.lane.b32.xlu0 %v149, 112
    %v293 = vpop.permute.xlu0 %292
    %294 = vrot.lane.b32.xlu0 %v150, 112
    %v295 = vpop.permute.xlu0 %294
    %296 = vrot.lane.b32.xlu0 %v151, 112
    %v297 = vpop.permute.xlu0 %296
    %298 = vrot.lane.b32.xlu0 %v152, 112
    %v299 = vpop.permute.xlu0 %298
    %v305 = vsel %vm178, %v284, 0
    %v308 = vsel %vm178, %v285, 0
    %v311 = vsel %vm178, %v286, 0
    %v314 = vsel %vm178, %v287, 0
    %316 = vmatprep.subr.mxu0 0.0
    %317 = vmatpush1.msra.mxu0 %v293
    %318 = vmatprep.subr.mxu0 0.0
    %319 = vmatpush1.msra.mxu0 %v295
    %320 = vmatprep.subr.mxu0 0.0
    %321 = vmatpush1.msra.mxu0 %v297
    %322 = vmatprep.subr.mxu0 0.0
    %323 = vmatpush1.msra.mxu0 %v299
    %324 = vmatprep.subr.mxu0 0.0
    %325 = vmatpush1.msra.mxu0 0.0
    %326 = vmatprep.subr.mxu0 0.0
    %327 = vmatpush1.msra.mxu0 0.0
    %328 = vmatprep.subr.mxu0 0.0
    %329 = vmatpush1.msra.mxu0 0.0
    %330 = vmatprep.subr.mxu0 0.0
    %331 = vmatpush1.msra.mxu0 0.0
    %332 = vmatprep.subr.mxu0 0.0
    %333 = vmatpush1.msra.mxu0 0.0
    %334 = vmatprep.subr.mxu0 0.0
    %335 = vmatpush1.msra.mxu0 0.0
    %336 = vmatprep.subr.mxu0 0.0
    %337 = vmatpush1.msra.mxu0 0.0
    %338 = vmatprep.subr.mxu0 0.0
    %339 = vmatpush1.msra.mxu0 0.0
    %340 = vmatprep.subr.mxu0 0.0
    %341 = vmatpush1.msra.mxu0 0.0
    %342 = vmatprep.subr.mxu0 0.0
    %343 = vmatpush1.msra.mxu0 0.0
    %344 = vmatprep.subr.mxu0 0.0
    %345 = vmatpush1.msra.mxu0 0.0
    %346 = vmatprep.subr.mxu0 0.0
    %347 = vmatpush1.msra.mxu0 0.0
    %348 = vmatprep.subr.mxu0 0.0
    %349 = vmatpush1.msra.mxu0 0.0
    %350 = vmatprep.subr.mxu0 0.0
    %351 = vmatpush1.msra.mxu0 0.0
    %352 = vmatprep.subr.mxu0 0.0
    %353 = vmatpush1.msra.mxu0 0.0
    %354 = vmatprep.subr.mxu0 0.0
    %355 = vmatpush1.msra.mxu0 0.0
    %356 = vmatprep.subr.mxu0 0.0
    %357 = vmatpush1.msra.mxu0 0.0
    %358 = vmatprep.subr.mxu0 0.0
    %359 = vmatpush1.msra.mxu0 0.0
    %360 = vmatprep.subr.mxu0 0.0
    %361 = vmatpush1.msra.mxu0 0.0
    %362 = vmatprep.subr.mxu0 0.0
    %363 = vmatpush1.msra.mxu0 0.0
    %364 = vmatprep.subr.mxu0 0.0
    %365 = vmatpush1.msra.mxu0 0.0
    %366 = vmatprep.subr.mxu0 0.0
    %367 = vmatpush1.msra.mxu0 0.0
    %368 = vmatprep.subr.mxu0 0.0
    %369 = vmatpush1.msra.mxu0 0.0
    %370 = vmatprep.subr.mxu0 0.0
    %371 = vmatpush1.msra.mxu0 0.0
    %372 = vmatprep.subr.mxu0 0.0
    %373 = vmatpush1.msra.mxu0 0.0
    %374 = vmatprep.subr.mxu0 0.0
    %375 = vmatpush1.msra.mxu0 0.0
    %376 = vmatprep.subr.mxu0 0.0
    %377 = vmatpush1.msra.mxu0 0.0
    %378 = vmatprep.subr.mxu0 0.0
    %379 = vmatpush1.msra.mxu0 0.0
    %380 = vmatprep.mubr.f32.mxu0 0.0
    %381 = vmatmul.mubr.f32.gmra.mrb[0].mxu0 %v305
    %v382 = vpop.f32.mrb[0].mxu0
    %v383 = vadd.f32 0.0, %v382
    %v384 = vpop.f32.mrb[0].mxu0
    %385 = vmatprep.mubr.f32.mxu0 0.0
    %386 = vmatmul.mubr.f32.gmra.mrb[0].mxu0 %v308
    %v387 = vpop.f32.mrb[0].mxu0
    %v388 = vadd.f32 0.0, %v387
    %v389 = vpop.f32.mrb[0].mxu0
    %390 = vmatprep.mubr.f32.mxu0 0.0
    %391 = vmatmul.mubr.f32.gmra.mrb[0].mxu0 %v311
    %v392 = vpop.f32.mrb[0].mxu0
    %v393 = vadd.f32 0.0, %v392
    %v394 = vpop.f32.mrb[0].mxu0
    %395 = vmatprep.mubr.f32.mxu0 0.0
    %396 = vmatmul.mubr.f32.gmra.mrb[0].mxu0 %v314
    %v397 = vpop.f32.mrb[0].mxu0
    %v398 = vadd.f32 0.0, %v397
    %v399 = vpop.f32.mrb[0].mxu0
    %400 = vdwg.mxu0
    %405 = vrot.lane.b32.xlu0 %v383, 8
    %v406 = vpop.permute.xlu0 %405
    %407 = vrot.lane.b32.xlu0 %v388, 8
    %v408 = vpop.permute.xlu0 %407
    %409 = vrot.lane.b32.xlu0 %v393, 8
    %v410 = vpop.permute.xlu0 %409
    %411 = vrot.lane.b32.xlu0 %v398, 8
    %v412 = vpop.permute.xlu0 %411
    %vm417 = vcmask 64512
    %v418 = vsel %vm417, %v258, %v406
    %v419 = vsel %vm417, %v263, %v408
    %v420 = vsel %vm417, %v268, %v410
    %v421 = vsel %vm417, %v273, %v412
    %426 = vrot.lane.b32.xlu0 %v258, 120
    %v427 = vpop.permute.xlu0 %426
    %428 = vrot.lane.b32.xlu0 %v263, 120
    %v429 = vpop.permute.xlu0 %428
    %430 = vrot.lane.b32.xlu0 %v268, 120
    %v431 = vpop.permute.xlu0 %430
    %432 = vrot.lane.b32.xlu0 %v273, 120
    %v433 = vpop.permute.xlu0 %432
    %v438 = vsel %vm417, %v427, %v383
    %v439 = vsel %vm417, %v429, %v388
    %v440 = vsel %vm417, %v431, %v393
    %v441 = vsel %vm417, %v433, %v398
    %443 = vset.pattern.permute.xlu0 0
    %444 = vperm.xlu0 %443, %v162
    %v445 = vpop.permute.xlu0 %444
    %448 = vset.pattern.permute.xlu0 0
    %449 = vperm.xlu0 %448, %v163
    %v450 = vpop.permute.xlu0 %449
    %453 = vset.pattern.permute.xlu0 0
    %454 = vperm.xlu0 %453, %v164
    %v455 = vpop.permute.xlu0 %454
    %458 = vset.pattern.permute.xlu0 0
    %459 = vperm.xlu0 %458, %v165
    %v460 = vpop.permute.xlu0 %459
    %v462 = vmul.f32 %v418, %v445
    %v463 = vmul.f32 %v419, %v450
    %v464 = vmul.f32 %v420, %v455
    %v465 = vmul.f32 %v421, %v460
    %v466 = vmul.f32 %v438, %v445
    %v467 = vmul.f32 %v439, %v450
    %v468 = vmul.f32 %v440, %v455
    %v469 = vmul.f32 %v441, %v460
    %v470 = vmax.f32 %v462, 0.0
    %v471 = vmax.f32 %v463, 0.0
    %v472 = vmax.f32 %v464, 0.0
    %v473 = vmax.f32 %v465, 0.0
    %v474 = vmax.f32 %v466, 0.0
    %v475 = vmax.f32 %v467, 0.0
    %v476 = vmax.f32 %v468, 0.0
    %v477 = vmax.f32 %v469, 0.0
    %482 = vrot.lane.b32.xlu0 %v474, 16
    %v483 = vpop.permute.xlu0 %482
    %484 = vrot.lane.b32.xlu0 %v475, 16
    %v485 = vpop.permute.xlu0 %484
    %486 = vrot.lane.b32.xlu0 %v476, 16
    %v487 = vpop.permute.xlu0 %486
    %488 = vrot.lane.b32.xlu0 %v477, 16
    %v489 = vpop.permute.xlu0 %488
    %v494 = vsel %vm27, %v470, %v483
    %v495 = vsel %vm27, %v471, %v485
    %v496 = vsel %vm27, %v472, %v487
    %v497 = vsel %vm27, %v473, %v489
    %498 = vst.msk [vmem:[#allocation2] sm:$0xff] %vm178, %v494
    %499 = vst.msk [vmem:[#allocation2 + $0x8] sm:$0xff] %vm178, %v495
    %500 = vst.msk [vmem:[#allocation2 + $0x10] sm:$0xff] %vm178, %v496
    %501 = vst.msk [vmem:[#allocation2 + $0x18] sm:$0xff] %vm178, %v497
    // Predicated region
    $region22: #{tpu_custom_call.1} parent=1 // pred_check
      _
    $region23: #{tpu_custom_call.1} parent=1 // pred_check_branch
      %503 = sbr.rel (0) target = $region25
    $region24: #{tpu_custom_call.1} parent=1 // pred_region
      %s505 = ssub.s32 512, 512
      %506 = vsyncadd [#allocation3], %s505
      %s507 = sshll.u32 [#allocation2], 4
      %s508 = int_to_ptr.vmem [resolvable:$true] %s507
      %513 = dma.vmem_to_hbm [thread:$0]  %s508, 512, %s5, [#allocation3], 128, 128, 8
    $region25: #{tpu_custom_call.1} parent=1 // pred_fallthru
      _
    // Predicated region
    $region26: #{tpu_custom_call.1} parent=1 // pred_check
      _
    $region27: #{tpu_custom_call.1} parent=1 // pred_check_branch
      %515 = sbr.rel (0) target = $region29
    $region28: #{tpu_custom_call.1} parent=1 // pred_region
      %516 = dma.done [#allocation3], 512
    $region29: #{tpu_custom_call.1} parent=1 // pred_fallthru
      _
    %517 = vsyncpa [#allocation3], 1

</llo_original>
